<compile_context>
chip_gen: v6e
topology: v6e:2x2x1
jax: 0.10.0
libtpu: 0.0.40
codegen_flags: <defaults>
</compile_context>

<pallas_src>
import functools

import numpy as np
import jax
import jax.numpy as jnp
from jax.experimental import pallas as pl
from jax.experimental.pallas import tpu as pltpu

TEMP = 50.0   # module hardcodes self.temp = 50
EPS = 1e-8    # torch.cosine_similarity default eps (clamps the norm product)
LANE = 128
MAX_TILE_M = 4096


def _round_up(x, m):
    return ((x + m - 1) // m) * m


@functools.lru_cache(maxsize=1)
def _vmem_budget_bytes():
    """~3/4 of per-core VMEM: ~48 MiB on v7x (64 MiB), ~96 MiB on v5e/v6e (128 MiB).

    Falls back to a conservative 48 MiB budget if the query is unavailable.
    """
    cap = 64 * 1024 * 1024
    try:
        cap = int(pltpu.get_tpu_info().vmem_capacity_bytes)
    except Exception:
        pass
    return max((cap * 3) // 4, 16 * 1024 * 1024)


def _pick_tile_m(rows, d, itemsize, bs):
    """Size the pair-axis tile from the VMEM byte budget (per perf review)."""
    budget = _vmem_budget_bytes()
    # Resident anchor block (conservatively assume it is double-buffered).
    anchor_bytes = 2 * bs * d * itemsize
    # Per candidate row: double-buffered native-dtype tile + in-kernel f32
    # copy/square temporaries + the (bs, tile_m) f32 dots / one-hot
    # intermediates + lane-dense per-row scalars.
    per_row = d * (2 * itemsize + 2 * 4) + bs * 8 + 64
    avail = max(budget - anchor_bytes - (4 << 20), 1 << 20)
    tile_m = int(avail // per_row)
    tile_m = max(LANE, min(tile_m, MAX_TILE_M))
    tile_m = (tile_m // LANE) * LANE
    # Never tile wider than the (lane-rounded) row count.
    tile_m = min(tile_m, _round_up(max(rows, 1), LANE))
    return tile_m


# ---------------------------------------------------------------------------
# Phase 1: per-row temperature-scaled cosine similarity ("preds"), lane-dense.
# ---------------------------------------------------------------------------
def _row_preds_kernel(idx_ref, an2_ref, anchor_ref, cand_ref, out_ref, *, temp, eps):
    """out[0, m] = temp * cos(anchor[idx[m]], cand[m]) for one TILE_M tile."""
    anchor = anchor_ref[...]                                 # (bs, D) native dtype
    cand = cand_ref[...]                                     # (TILE_M, D) native dtype
    idx = idx_ref[...]                                       # (1, TILE_M) int32
    na2 = an2_ref[...]                                       # (1, TILE_M) f32 = ||a[idx]||^2

    bs = anchor.shape[0]
    tile_m = cand.shape[0]

    # <anchor[j], cand[m]> for every (j, m) on the MXU, lane-dense in m.
    # Operands stay in their native dtype (bf16 feeds the MXU directly).
    dots = jax.lax.dot_general(
        anchor, cand, (((1,), (1,)), ((), ())),
        preferred_element_type=jnp.float32)                  # (bs, TILE_M)

    # ||cand[m]||^2 via the MXU so the result lands lane-dense directly
    # (avoids a (TILE_M, 1) sublane reduce + transpose). Square in f32 (VPU).
    cand_f32 = cand.astype(jnp.float32)
    ones_row = jnp.ones((1, cand.shape[1]), jnp.float32)
    nb2 = jax.lax.dot_general(
        ones_row, cand_f32 * cand_f32, (((1,), (1,)), ((), ())),
        preferred_element_type=jnp.float32)                  # (1, TILE_M)

    # One-hot selection of the per-row anchor dot product.
    row_ids = jax.lax.broadcasted_iota(jnp.int32, (bs, tile_m), 0)
    onehot = row_ids == idx                                  # (bs, TILE_M)
    dot_sel = jnp.sum(jnp.where(onehot, dots, 0.0), axis=0, keepdims=True)

    # torch.cosine_similarity: dot / max(||a|| * ||b||, eps), then * temp.
    denom = jnp.maximum(jnp.sqrt(na2 * nb2), eps)
    out_ref[...] = (dot_sel / denom) * temp


def _row_preds(anchor, cand, idx_np):
    """Returns preds, lane-dense, shape (1, M_pad) with M_pad = num_tiles*tile_m."""
    anchor = jnp.asarray(anchor)
    cand = jnp.asarray(cand)
    rows, d = int(cand.shape[0]), int(cand.shape[1])
    bs = int(anchor.shape[0])
    assert rows > 0
    itemsize = int(jnp.dtype(cand.dtype).itemsize)

    tile_m = _pick_tile_m(rows, d, itemsize, bs)
    num_tiles = int(pl.cdiv(rows, tile_m))
    rows_pad = num_tiles * tile_m

    # Tiny lane-dense per-row metadata (int32 idx + precomputed anchor norms).
    idx_pad = np.zeros((1, rows_pad), np.int32)
    idx_pad[0, :rows] = np.asarray(idx_np, np.int32)
    idx_pad = jnp.asarray(idx_pad)

    # Hoisted out of the grid loop: ||anchor||^2 once, gathered per pair row.
    an2 = jnp.sum(jnp.square(anchor.astype(jnp.float32)), axis=-1)   # (bs,)
    an2_rows = jnp.take(an2, idx_pad)                                 # (1, rows_pad) f32

    kernel = functools.partial(_row_preds_kernel, temp=TEMP, eps=EPS)
    vmem_limit = int(_vmem_budget_bytes())
    return pl.pallas_call(
        kernel,
        out_shape=jax.ShapeDtypeStruct((1, rows_pad), jnp.float32),
        grid=(num_tiles,),
        in_specs=[
            pl.BlockSpec((1, tile_m), lambda i: (0, i)),     # idx (lane-dense i32)
            pl.BlockSpec((1, tile_m), lambda i: (0, i)),     # ||anchor[idx]||^2
            pl.BlockSpec((bs, d), lambda i: (0, 0)),         # anchor (resident block)
            pl.BlockSpec((tile_m, d), lambda i: (i, 0)),     # candidates (pipelined;
                                                             # last tile may over-hang,
                                                             # garbage lanes masked later)
        ],
        out_specs=pl.BlockSpec((1, tile_m), lambda i: (0, i)),
        compiler_params=pltpu.CompilerParams(
            dimension_semantics=("parallel",),               # megacore on v7x
            vmem_limit_bytes=vmem_limit,
        ),
        cost_estimate=pl.CostEstimate(
            flops=2 * rows * d * (bs + 1),
            transcendentals=0,
            bytes_accessed=rows * d * itemsize + bs * d * itemsize
            + 3 * rows_pad * 4,
        ),
    )(idx_pad, an2_rows, anchor, cand)


# ---------------------------------------------------------------------------
# Phase 2: softmax over pairs + CrossEntropy(softmax(preds), 0/1 targets).
# P and N arrive as scalar-prefetch SMEM values -> same compiled kernel for
# every (P, N) that shares the padded widths.
# ---------------------------------------------------------------------------
def _finalize_kernel(cnt_ref, pp_ref, pn_ref, out_ref):
    p = cnt_ref[0]
    n = cnt_ref[1]
    pp = pp_ref[...]                                         # (1, P_pad) f32
    pn = pn_ref[...]                                         # (1, N_pad) f32
    neg_big = jnp.float32(-1e30)
    mp = jax.lax.broadcasted_iota(jnp.int32, pp.shape, 1) < p
    mn = jax.lax.broadcasted_iota(jnp.int32, pn.shape, 1) < n

    # nn.Softmax over the combined (P + N) pair axis, tail padding masked out.
    pmax = jnp.maximum(
        jnp.max(jnp.where(mp, pp, neg_big), axis=1, keepdims=True),
        jnp.max(jnp.where(mn, pn, neg_big), axis=1, keepdims=True))
    ep = jnp.where(mp, jnp.exp(pp - pmax), 0.0)
    en = jnp.where(mn, jnp.exp(pn - pmax), 0.0)
    inv_denom = 1.0 / (jnp.sum(ep, axis=1, keepdims=True)
                       + jnp.sum(en, axis=1, keepdims=True))
    sp = ep * inv_denom
    sn = en * inv_denom

    # nn.CrossEntropyLoss(softmax(preds), y) with y = 1 on positive rows:
    #   = -sum_pos log_softmax(s) = P * lse(s) - sum_pos s
    smax = jnp.maximum(
        jnp.max(jnp.where(mp, sp, neg_big), axis=1, keepdims=True),
        jnp.max(jnp.where(mn, sn, neg_big), axis=1, keepdims=True))
    z = (jnp.sum(jnp.where(mp, jnp.exp(sp - smax), 0.0), axis=1, keepdims=True)
         + jnp.sum(jnp.where(mn, jnp.exp(sn - smax), 0.0), axis=1, keepdims=True))
    lse = jnp.log(z) + smax
    sum_sp = jnp.sum(jnp.where(mp, sp, 0.0), axis=1, keepdims=True)
    ce = p.astype(jnp.float32) * lse - sum_sp
    out_ref[...] = ce / (p + n).astype(jnp.float32)


def _finalize(preds_pos, preds_neg, p, n):
    counts = jnp.asarray([p, n], dtype=jnp.int32)
    pw = int(preds_pos.shape[-1])
    nw = int(preds_neg.shape[-1])
    # TODO(synk): if P+N can reach many millions of pairs, tile this reduction
    # over a grid with per-tile partial max/sum instead of one full-width block.
    out = pl.pallas_call(
        _finalize_kernel,
        out_shape=jax.ShapeDtypeStruct((1, 1), jnp.float32),
        grid_spec=pltpu.PrefetchScalarGridSpec(
            num_scalar_prefetch=1,
            grid=(1,),
            in_specs=[
                pl.BlockSpec((1, pw), lambda i, cnt: (0, 0)),
                pl.BlockSpec((1, nw), lambda i, cnt: (0, 0)),
            ],
            out_specs=pl.BlockSpec((1, 1), lambda i, cnt: (0, 0)),
        ),
        compiler_params=pltpu.CompilerParams(
            vmem_limit_bytes=int(_vmem_budget_bytes()),
        ),
    )(counts, preds_pos, preds_neg)
    return out[0, 0]


# ---------------------------------------------------------------------------
# Public wrapper (host glue: index build from python-level lens).
# ---------------------------------------------------------------------------
def wsdm_cross_entropy_loss(anchor, positive, negative, positive_lens, negative_lens):
    """JAX/Pallas equivalent of WsdmCrossEntropyLoss.forward."""
    positive_lens = np.asarray(positive_lens, dtype=np.int64)
    negative_lens = np.asarray(negative_lens, dtype=np.int64)
    pos_idx = np.repeat(np.arange(len(positive_lens)), positive_lens)
    neg_idx = np.repeat(np.arange(len(negative_lens)), negative_lens)

    p = int(positive.shape[0])
    n = int(negative.shape[0])
    assert len(pos_idx) == p and len(neg_idx) == n

    anchor = jnp.asarray(anchor)
    # Phase 1 runs once on `positive` and once on `negative`, so the
    # concat(positive, negative) copy is never materialized in HBM.
    preds_pos = _row_preds(anchor, positive, pos_idx)       # (1, P_pad)
    preds_neg = _row_preds(anchor, negative, neg_idx)       # (1, N_pad)
    return _finalize(preds_pos, preds_neg, p, n)


def _reference_loss(anchor, positive, negative, positive_lens, negative_lens):
    """Pure-JAX reference mirroring the PyTorch module."""
    positive_lens = np.asarray(positive_lens, dtype=np.int64)
    negative_lens = np.asarray(negative_lens, dtype=np.int64)
    idx = np.concatenate([
        np.repeat(np.arange(len(positive_lens)), positive_lens),
        np.repeat(np.arange(len(negative_lens)), negative_lens),
    ])
    a = jnp.asarray(anchor)[idx]
    b = jnp.concatenate([positive, negative], axis=0)
    dot = jnp.sum(a * b, axis=-1)
    na = jnp.sqrt(jnp.sum(a * a, axis=-1))
    nb = jnp.sqrt(jnp.sum(b * b, axis=-1))
    preds = dot / jnp.maximum(na * nb, EPS) * TEMP
    s = jax.nn.softmax(preds, axis=0)
    logz = jax.nn.log_softmax(s, axis=0)
    P, N = positive.shape[0], negative.shape[0]
    y = jnp.concatenate([jnp.ones((P,), jnp.float32), jnp.zeros((N,), jnp.float32)])
    ce = -jnp.sum(y * logz)
    return ce / (P + N)


if __name__ == "__main__":
    key = jax.random.PRNGKey(0)
    bs, dim = 4, 32
    positive_lens = [1, 3, 2, 2]   # P = 8
    negative_lens = [2, 2, 3, 1]   # N = 8
    P, N = sum(positive_lens), sum(negative_lens)

    k1, k2, k3 = jax.random.split(key, 3)
    anchor = jax.random.normal(k1, (bs, dim), dtype=jnp.float32)
    positive = jax.random.normal(k2, (P, dim), dtype=jnp.float32)
    negative = jax.random.normal(k3, (N, dim), dtype=jnp.float32)

    loss = wsdm_cross_entropy_loss(anchor, positive, negative,
                                   positive_lens, negative_lens)
    loss = jax.block_until_ready(loss)

    ref = jax.block_until_ready(
        _reference_loss(anchor, positive, negative, positive_lens, negative_lens)
    )
    # Slightly relaxed tolerance: the kernel reduces over D on the MXU
    # (different f32 accumulation order than the VPU reference).
    assert np.allclose(np.asarray(loss), np.asarray(ref), rtol=1e-4, atol=1e-4), (
        loss, ref
    )
    print("KERNEL_OK")
</pallas_src>

<mosaic_0001>
module attributes {stable_mosaic.version = 11 : i64} {
  func.func @_row_preds_kernel(%arg0: i32, %arg1: memref<1x128xi32, #tpu.memory_space<vmem>>, %arg2: memref<1x128xf32, #tpu.memory_space<vmem>>, %arg3: memref<4x32xf32, #tpu.memory_space<vmem>>, %arg4: memref<128x32xf32, #tpu.memory_space<vmem>>, %arg5: memref<1x128xf32, #tpu.memory_space<vmem>>) attributes {dimension_semantics = [#tpu.dimension_semantics<parallel>], iteration_bounds = array<i64: 1>, scalar_prefetch = 0 : i64, scratch_operands = 0 : i64, tpu.core_type = #tpu.core_type<tc>, window_params = [{transform_indices = @transform_0, window_bounds = array<i64: 1, 128>}, {transform_indices = @transform_1, window_bounds = array<i64: 1, 128>}, {pipeline_mode = #tpu.pipeline_mode<synchronous>, transform_indices = @transform_2, window_bounds = array<i64: 4, 32>}, {transform_indices = @transform_3, window_bounds = array<i64: 128, 32>}, {transform_indices = @transform_4, window_bounds = array<i64: 1, 128>}]} {
    %c0 = arith.constant 0 : index
    %c0_0 = arith.constant 0 : index
    %0 = vector.load %arg3[%c0, %c0_0] : memref<4x32xf32, #tpu.memory_space<vmem>>, vector<4x32xf32>
    %c0_1 = arith.constant 0 : index
    %c0_2 = arith.constant 0 : index
    %1 = vector.load %arg4[%c0_1, %c0_2] : memref<128x32xf32, #tpu.memory_space<vmem>>, vector<128x32xf32>
    %c0_3 = arith.constant 0 : index
    %c0_4 = arith.constant 0 : index
    %2 = vector.load %arg1[%c0_3, %c0_4] : memref<1x128xi32, #tpu.memory_space<vmem>>, vector<1x128xi32>
    %c0_5 = arith.constant 0 : index
    %c0_6 = arith.constant 0 : index
    %3 = vector.load %arg2[%c0_5, %c0_6] : memref<1x128xf32, #tpu.memory_space<vmem>>, vector<1x128xf32>
    %cst = arith.constant dense<0.000000e+00> : vector<4x128xf32>
    %4 = tpu.matmul %0, %1, %cst {dimension_numbers = #tpu.dot_dimension_numbers<[1], [1], [0], [0], [0, 0, 1, 0], [], []>} : vector<4x32xf32>, vector<128x32xf32>, vector<4x128xf32> -> vector<4x128xf32>
    %cst_7 = arith.constant 1.000000e+00 : f32
    %5 = vector.broadcast %cst_7 : f32 to vector<1x32xf32>
    %6 = arith.mulf %1, %1 : vector<128x32xf32>
    %cst_8 = arith.constant dense<0.000000e+00> : vector<1x128xf32>
    %7 = tpu.matmul %5, %6, %cst_8 {dimension_numbers = #tpu.dot_dimension_numbers<[1], [1], [0], [0], [0, 0, 1, 0], [], []>} : vector<1x32xf32>, vector<128x32xf32>, vector<1x128xf32> -> vector<1x128xf32>
    %8 = tpu.iota {dimensions = array<i32: 0>} : vector<4x128xi32>
    %9 = vector.broadcast %2 : vector<1x128xi32> to vector<4x128xi32>
    %10 = arith.cmpi eq, %8, %9 : vector<4x128xi32>
    %cst_9 = arith.constant 0.000000e+00 : f32
    %11 = vector.broadcast %cst_9 : f32 to vector<4x128xf32>
    %12 = arith.select %10, %4, %11 : vector<4x128xi1>, vector<4x128xf32>
    %cst_10 = arith.constant dense<0.000000e+00> : vector<128xf32>
    %13 = vector.multi_reduction <add>, %12, %cst_10 [0] : vector<4x128xf32> to vector<128xf32>
    %14 = vector.shape_cast %13 : vector<128xf32> to vector<1x128xf32>
    %15 = arith.mulf %3, %7 : vector<1x128xf32>
    %16 = math.sqrt %15 : vector<1x128xf32>
    %cst_11 = arith.constant 9.99999993E-9 : f32
    %17 = vector.broadcast %cst_11 : f32 to vector<1x128xf32>
    %18 = arith.maximumf %16, %17 : vector<1x128xf32>
    %19 = arith.divf %14, %18 : vector<1x128xf32>
    %cst_12 = arith.constant 5.000000e+01 : f32
    %20 = vector.broadcast %cst_12 : f32 to vector<1x128xf32>
    %21 = arith.mulf %19, %20 : vector<1x128xf32>
    %c0_13 = arith.constant 0 : index
    %c0_14 = arith.constant 0 : index
    %22 = vector.load %arg5[%c0_13, %c0_14] : memref<1x128xf32, #tpu.memory_space<vmem>>, vector<1x128xf32>
    tpu.vector_store %arg5[%c0_13, %c0_14], %21 {strides = array<i32>} : memref<1x128xf32, #tpu.memory_space<vmem>>, vector<1x128xf32>,
    return
  }
  func.func @transform_0(%arg0: i32) -> (i32, i32) {
    %c0_i32 = arith.constant 0 : i32
    %c0_i32_0 = arith.constant 0 : i32
    return %c0_i32, %arg0 : i32, i32
  }
  func.func @transform_1(%arg0: i32) -> (i32, i32) {
    %c0_i32 = arith.constant 0 : i32
    %c0_i32_0 = arith.constant 0 : i32
    return %c0_i32, %arg0 : i32, i32
  }
  func.func @transform_2(%arg0: i32) -> (i32, i32) {
    %c0_i32 = arith.constant 0 : i32
    %c0_i32_0 = arith.constant 0 : i32
    %c0_i32_1 = arith.constant 0 : i32
    return %c0_i32, %c0_i32_0 : i32, i32
  }
  func.func @transform_3(%arg0: i32) -> (i32, i32) {
    %c0_i32 = arith.constant 0 : i32
    %c0_i32_0 = arith.constant 0 : i32
    return %arg0, %c0_i32 : i32, i32
  }
  func.func @transform_4(%arg0: i32) -> (i32, i32) {
    %c0_i32 = arith.constant 0 : i32
    %c0_i32_0 = arith.constant 0 : i32
    return %c0_i32, %arg0 : i32, i32
  }
}

</mosaic_0001>

<llo_original>
// kernel: tpu_custom_call.1
$region0: #{tpu_custom_call.1}
  #allocation0 [shape = 'u32[]', space=smem, size = 0x4, offset = 0x4, fixed_abs, tag = 'smem constant byte address 0x4 - core index']
  #allocation1 [shape = 'u32[144,128]{1,0:T(1,128)}', space=vmem, size = 0x12000, scoped, tag = 'internal scratch']
  %s0 = inlined_call_operand.hbm [shape: s32[1,128], index: 0, kind: input, shape index: {}]
  %s1 = inlined_call_operand.vmem [shape: f32[1,128], index: 1, kind: input, shape index: {}]
  %s2 = inlined_call_operand.hbm [shape: f32[4,32], index: 2, kind: input, shape index: {}]
  %s3 = inlined_call_operand.hbm [shape: f32[8,32], index: 3, kind: input, shape index: {}]
  %s4 = inlined_call_operand.hbm [shape: f32[1,128], index: 4, kind: output, shape index: {}]
  %s5 = sld [smem:[#allocation0]]
  $region38: #{tpu_custom_call.1} parent=0
    _
  %s7 = ssub.s32 1, %s5
  %s8 = scalar_select 0, %s7, %s5
  $region1: #{tpu_custom_call.1} parent=0
    #allocation2 [shape = 'u8[512]{0}', space=vmem, size = 0x400, scoped, tag = 'input window, operand 0, single buffered']
    #allocation3 [shape = 's32[1]{0}', space=sflag, size = 0x4, scoped, tag = 'scoped memory for tpu_custom_call.1']
    #allocation4 [shape = 's32[1]{0}', space=sflag, size = 0x4, scoped, tag = 'scoped memory for tpu_custom_call.1']
    #allocation5 [shape = 'u8[2048]{0}', space=vmem, size = 0x800, scoped, tag = 'input window, operand 2, single buffered']
    #allocation6 [shape = 's32[1]{0}', space=sflag, size = 0x4, scoped, tag = 'scoped memory for tpu_custom_call.1']
    #allocation7 [shape = 'u8[65536]{0}', space=vmem, size = 0x10000, scoped, tag = 'input window, operand 3, single buffered']
    #allocation8 [shape = 'u8[512]{0}', space=vmem, size = 0x400, scoped, tag = 'output window, operand 0, single buffered']
    %9 = vsyncpa [#allocation3], 0
    %10 = vsyncpa [#allocation6], 0
    %11 = vsyncpa [#allocation4], 0
    // Predicated region
    $region2: #{tpu_custom_call.1} parent=1 // pred_check
      _
    $region3: #{tpu_custom_call.1} parent=1 // pred_check_branch
      %13 = sbr.rel (0) target = $region5
    $region4: #{tpu_custom_call.1} parent=1 // pred_region
      %s15 = ssub.s32 16, 16
      %16 = vsyncadd [#allocation3], %s15
      %s18 = sshll.u32 [#allocation2], 4
      %s19 = int_to_ptr.vmem [resolvable:$true] %s18
      %21 = dma.hbm_to_vmem [thread:$0]  %s0, 16, %s19, [#allocation3]
    $region5: #{tpu_custom_call.1} parent=1 // pred_fallthru
      _
    // Predicated region
    $region6: #{tpu_custom_call.1} parent=1 // pred_check
      _
    $region7: #{tpu_custom_call.1} parent=1 // pred_check_branch
      %23 = sbr.rel (0) target = $region9
    $region8: #{tpu_custom_call.1} parent=1 // pred_region
      _
    $region9: #{tpu_custom_call.1} parent=1 // pred_fallthru
      _
    // Predicated region
    $region10: #{tpu_custom_call.1} parent=1 // pred_check
      _
    $region11: #{tpu_custom_call.1} parent=1 // pred_check_branch
      %25 = sbr.rel (0) target = $region13
    $region12: #{tpu_custom_call.1} parent=1 // pred_region
      %s27 = ssub.s32 64, 64
      %28 = vsyncadd [#allocation6], %s27
      %s30 = sshll.u32 [#allocation5], 4
      %s31 = int_to_ptr.vmem [resolvable:$true] %s30
      %33 = dma.hbm_to_vmem [thread:$0]  %s2, 64, %s31, [#allocation6]
    $region13: #{tpu_custom_call.1} parent=1 // pred_fallthru
      _
    // Predicated region
    $region14: #{tpu_custom_call.1} parent=1 // pred_check
      _
    $region15: #{tpu_custom_call.1} parent=1 // pred_check_branch
      %35 = sbr.rel (0) target = $region17
    $region16: #{tpu_custom_call.1} parent=1 // pred_region
      %s37 = ssub.s32 2048, 128
      %38 = vsyncadd [#allocation6], %s37
      %s39 = sshll.u32 [#allocation7], 4
      %s40 = int_to_ptr.vmem [resolvable:$true] %s39
      %45 = dma.hbm_to_vmem [thread:$0]  %s3, 128, %s40, [#allocation6], 128, 128, 8
    $region17: #{tpu_custom_call.1} parent=1 // pred_fallthru
      _
    // Predicated region
    $region18: #{tpu_custom_call.1} parent=1 // pred_check
      _
    $region19: #{tpu_custom_call.1} parent=1 // pred_check_branch
      %47 = sbr.rel (0) target = $region21
    $region20: #{tpu_custom_call.1} parent=1 // pred_region
      %48 = dma.done [#allocation3], 16
    $region21: #{tpu_custom_call.1} parent=1 // pred_fallthru
      _
    // Predicated region
    $region22: #{tpu_custom_call.1} parent=1 // pred_check
      _
    $region23: #{tpu_custom_call.1} parent=1 // pred_check_branch
      %50 = sbr.rel (0) target = $region25
    $region24: #{tpu_custom_call.1} parent=1 // pred_region
      %51 = dma.done [#allocation6], 64
    $region25: #{tpu_custom_call.1} parent=1 // pred_fallthru
      _
    // Predicated region
    $region26: #{tpu_custom_call.1} parent=1 // pred_check
      _
    $region27: #{tpu_custom_call.1} parent=1 // pred_check_branch
      %53 = sbr.rel (0) target = $region29
    $region28: #{tpu_custom_call.1} parent=1 // pred_region
      %54 = dma.done [#allocation6], 2048
    $region29: #{tpu_custom_call.1} parent=1 // pred_fallthru
      _
    %v55 = vld [vmem:[#allocation5] sm:$0xf]
    %v56 = vld [vmem:[#allocation7] sm:$0xff]
    %v57 = vld [vmem:[#allocation7 + $0x8] sm:$0xff]
    %v58 = vld [vmem:[#allocation7 + $0x10] sm:$0xff]
    %v59 = vld [vmem:[#allocation7 + $0x18] sm:$0xff]
    %v60 = vld [vmem:[#allocation7 + $0x20] sm:$0xff]
    %v61 = vld [vmem:[#allocation7 + $0x28] sm:$0xff]
    %v62 = vld [vmem:[#allocation7 + $0x30] sm:$0xff]
    %v63 = vld [vmem:[#allocation7 + $0x38] sm:$0xff]
    %v64 = vld [vmem:[#allocation7 + $0x40] sm:$0xff]
    %v65 = vld [vmem:[#allocation7 + $0x48] sm:$0xff]
    %v66 = vld [vmem:[#allocation7 + $0x50] sm:$0xff]
    %v67 = vld [vmem:[#allocation7 + $0x58] sm:$0xff]
    %v68 = vld [vmem:[#allocation7 + $0x60] sm:$0xff]
    %v69 = vld [vmem:[#allocation7 + $0x68] sm:$0xff]
    %v70 = vld [vmem:[#allocation7 + $0x70] sm:$0xff]
    %v71 = vld [vmem:[#allocation7 + $0x78] sm:$0xff]
    %v72 = vld [vmem:[#allocation2] sm:$0x1]
    %v73 = vld [vmem:[%s1] sm:$0x1]
    %vm74 = vcmask 261120
    %v76 = vsel %vm74, %v55, 0
    %v79 = vsel %vm74, %v56, 0
    %v82 = vsel %vm74, %v57, 0
    %v85 = vsel %vm74, %v58, 0
    %v88 = vsel %vm74, %v59, 0
    %v91 = vsel %vm74, %v60, 0
    %v94 = vsel %vm74, %v61, 0
    %v97 = vsel %vm74, %v62, 0
    %v100 = vsel %vm74, %v63, 0
    %v103 = vsel %vm74, %v64, 0
    %v106 = vsel %vm74, %v65, 0
    %v109 = vsel %vm74, %v66, 0
    %v112 = vsel %vm74, %v67, 0
    %v115 = vsel %vm74, %v68, 0
    %v118 = vsel %vm74, %v69, 0
    %v121 = vsel %vm74, %v70, 0
    %v124 = vsel %vm74, %v71, 0
    %126 = vmatprep.subr.mxu0 0.0
    %127 = vmatpush1.xpose.msra.mxu0 %v124
    %128 = vmatprep.subr.mxu0 0.0
    %129 = vmatpush1.xpose.msra.mxu0 %v121
    %130 = vmatprep.subr.mxu0 0.0
    %131 = vmatpush1.xpose.msra.mxu0 %v118
    %132 = vmatprep.subr.mxu0 0.0
    %133 = vmatpush1.xpose.msra.mxu0 %v115
    %134 = vmatprep.subr.mxu0 0.0
    %135 = vmatpush1.xpose.msra.mxu0 %v112
    %136 = vmatprep.subr.mxu0 0.0
    %137 = vmatpush1.xpose.msra.mxu0 %v109
    %138 = vmatprep.subr.mxu0 0.0
    %139 = vmatpush1.xpose.msra.mxu0 %v106
    %140 = vmatprep.subr.mxu0 0.0
    %141 = vmatpush1.xpose.msra.mxu0 %v103
    %142 = vmatprep.subr.mxu0 0.0
    %143 = vmatpush1.xpose.msra.mxu0 %v100
    %144 = vmatprep.subr.mxu0 0.0
    %145 = vmatpush1.xpose.msra.mxu0 %v97
    %146 = vmatprep.subr.mxu0 0.0
    %147 = vmatpush1.xpose.msra.mxu0 %v94
    %148 = vmatprep.subr.mxu0 0.0
    %149 = vmatpush1.xpose.msra.mxu0 %v91
    %150 = vmatprep.subr.mxu0 0.0
    %151 = vmatpush1.xpose.msra.mxu0 %v88
    %152 = vmatprep.subr.mxu0 0.0
    %153 = vmatpush1.xpose.msra.mxu0 %v85
    %154 = vmatprep.subr.mxu0 0.0
    %155 = vmatpush1.xpose.msra.mxu0 %v82
    %156 = vmatprep.subr.mxu0 0.0
    %157 = vmatpush1.xpose.msra.mxu0 %v79
    %158 = vmatprep.subr.mxu0 0.0
    %159 = vmatpush2.xpose.msra.mxu0 0.0
    %160 = vmatprep.subr.mxu0 0.0
    %161 = vmatpush2.xpose.msra.mxu0 0.0
    %162 = vmatprep.subr.mxu0 0.0
    %163 = vmatpush2.xpose.msra.mxu0 0.0
    %164 = vmatprep.subr.mxu0 0.0
    %165 = vmatpush2.xpose.msra.mxu0 0.0
    %166 = vmatprep.subr.mxu0 0.0
    %167 = vmatpush2.xpose.msra.mxu0 0.0
    %168 = vmatprep.subr.mxu0 0.0
    %169 = vmatpush2.xpose.msra.mxu0 0.0
    %170 = vmatprep.subr.mxu0 0.0
    %171 = vmatpush2.xpose.msra.mxu0 0.0
    %172 = vmatprep.subr.mxu0 0.0
    %173 = vmatpush2.xpose.msra.mxu0 0.0
    %174 = vmatprep.subr.mxu0 0.0
    %175 = vmatpush2.xpose.msra.mxu0 0.0
    %176 = vmatprep.subr.mxu0 0.0
    %177 = vmatpush2.xpose.msra.mxu0 0.0
    %178 = vmatprep.subr.mxu0 0.0
    %179 = vmatpush2.xpose.msra.mxu0 0.0
    %180 = vmatprep.subr.mxu0 0.0
    %181 = vmatpush2.xpose.msra.mxu0 0.0
    %182 = vmatprep.subr.mxu0 0.0
    %183 = vmatpush2.xpose.msra.mxu0 0.0
    %184 = vmatprep.subr.mxu0 0.0
    %185 = vmatpush2.xpose.msra.mxu0 0.0
    %186 = vmatprep.subr.mxu0 0.0
    %187 = vmatpush2.xpose.msra.mxu0 0.0
    %188 = vmatprep.subr.mxu0 0.0
    %189 = vmatpush2.xpose.msra.mxu0 0.0
    %190 = vmatprep.mubr.f32.mxu0 0.0
    %191 = vmatmul.mubr.f32.gmra.mxu0 %v76
    %v192 = vpop.f32.mrf.mxu0
    %v193 = vadd.f32 0.0, %v192
    %v194 = vpop.f32.mrf.mxu0
    %195 = vdwg.mxu0
    %v196 = vmul.f32 %v56, %v56
    %v197 = vmul.f32 %v57, %v57
    %v198 = vmul.f32 %v58, %v58
    %v199 = vmul.f32 %v59, %v59
    %v200 = vmul.f32 %v60, %v60
    %v201 = vmul.f32 %v61, %v61
    %v202 = vmul.f32 %v62, %v62
    %v203 = vmul.f32 %v63, %v63
    %v204 = vmul.f32 %v64, %v64
    %v205 = vmul.f32 %v65, %v65
    %v206 = vmul.f32 %v66, %v66
    %v207 = vmul.f32 %v67, %v67
    %v208 = vmul.f32 %v68, %v68
    %v209 = vmul.f32 %v69, %v69
    %v210 = vmul.f32 %v70, %v70
    %v211 = vmul.f32 %v71, %v71
    %v213 = vsel %vm74, 1.0, 0
    %v216 = vsel %vm74, %v196, 0
    %v219 = vsel %vm74, %v197, 0
    %v222 = vsel %vm74, %v198, 0
    %v225 = vsel %vm74, %v199, 0
    %v228 = vsel %vm74, %v200, 0
    %v231 = vsel %vm74, %v201, 0
    %v234 = vsel %vm74, %v202, 0
    %v237 = vsel %vm74, %v203, 0
    %v240 = vsel %vm74, %v204, 0
    %v243 = vsel %vm74, %v205, 0
    %v246 = vsel %vm74, %v206, 0
    %v249 = vsel %vm74, %v207, 0
    %v252 = vsel %vm74, %v208, 0
    %v255 = vsel %vm74, %v209, 0
    %v258 = vsel %vm74, %v210, 0
    %v261 = vsel %vm74, %v211, 0
    %263 = vmatprep.subr.mxu0 0.0
    %264 = vmatpush1.xpose.msra.mxu0 %v261
    %265 = vmatprep.subr.mxu0 0.0
    %266 = vmatpush1.xpose.msra.mxu0 %v258
    %267 = vmatprep.subr.mxu0 0.0
    %268 = vmatpush1.xpose.msra.mxu0 %v255
    %269 = vmatprep.subr.mxu0 0.0
    %270 = vmatpush1.xpose.msra.mxu0 %v252
    %271 = vmatprep.subr.mxu0 0.0
    %272 = vmatpush1.xpose.msra.mxu0 %v249
    %273 = vmatprep.subr.mxu0 0.0
    %274 = vmatpush1.xpose.msra.mxu0 %v246
    %275 = vmatprep.subr.mxu0 0.0
    %276 = vmatpush1.xpose.msra.mxu0 %v243
    %277 = vmatprep.subr.mxu0 0.0
    %278 = vmatpush1.xpose.msra.mxu0 %v240
    %279 = vmatprep.subr.mxu0 0.0
    %280 = vmatpush1.xpose.msra.mxu0 %v237
    %281 = vmatprep.subr.mxu0 0.0
    %282 = vmatpush1.xpose.msra.mxu0 %v234
    %283 = vmatprep.subr.mxu0 0.0
    %284 = vmatpush1.xpose.msra.mxu0 %v231
    %285 = vmatprep.subr.mxu0 0.0
    %286 = vmatpush1.xpose.msra.mxu0 %v228
    %287 = vmatprep.subr.mxu0 0.0
    %288 = vmatpush1.xpose.msra.mxu0 %v225
    %289 = vmatprep.subr.mxu0 0.0
    %290 = vmatpush1.xpose.msra.mxu0 %v222
    %291 = vmatprep.subr.mxu0 0.0
    %292 = vmatpush1.xpose.msra.mxu0 %v219
    %293 = vmatprep.subr.mxu0 0.0
    %294 = vmatpush1.xpose.msra.mxu0 %v216
    %295 = vmatprep.subr.mxu0 0.0
    %296 = vmatpush2.xpose.msra.mxu0 0.0
    %297 = vmatprep.subr.mxu0 0.0
    %298 = vmatpush2.xpose.msra.mxu0 0.0
    %299 = vmatprep.subr.mxu0 0.0
    %300 = vmatpush2.xpose.msra.mxu0 0.0
    %301 = vmatprep.subr.mxu0 0.0
    %302 = vmatpush2.xpose.msra.mxu0 0.0
    %303 = vmatprep.subr.mxu0 0.0
    %304 = vmatpush2.xpose.msra.mxu0 0.0
    %305 = vmatprep.subr.mxu0 0.0
    %306 = vmatpush2.xpose.msra.mxu0 0.0
    %307 = vmatprep.subr.mxu0 0.0
    %308 = vmatpush2.xpose.msra.mxu0 0.0
    %309 = vmatprep.subr.mxu0 0.0
    %310 = vmatpush2.xpose.msra.mxu0 0.0
    %311 = vmatprep.subr.mxu0 0.0
    %312 = vmatpush2.xpose.msra.mxu0 0.0
    %313 = vmatprep.subr.mxu0 0.0
    %314 = vmatpush2.xpose.msra.mxu0 0.0
    %315 = vmatprep.subr.mxu0 0.0
    %316 = vmatpush2.xpose.msra.mxu0 0.0
    %317 = vmatprep.subr.mxu0 0.0
    %318 = vmatpush2.xpose.msra.mxu0 0.0
    %319 = vmatprep.subr.mxu0 0.0
    %320 = vmatpush2.xpose.msra.mxu0 0.0
    %321 = vmatprep.subr.mxu0 0.0
    %322 = vmatpush2.xpose.msra.mxu0 0.0
    %323 = vmatprep.subr.mxu0 0.0
    %324 = vmatpush2.xpose.msra.mxu0 0.0
    %325 = vmatprep.subr.mxu0 0.0
    %326 = vmatpush2.xpose.msra.mxu0 0.0
    %327 = vmatprep.mubr.f32.mxu0 0.0
    %328 = vmatmul.mubr.f32.gmra.mxu0 %v213
    %v329 = vpop.f32.mrf.mxu0
    %v330 = vadd.f32 0.0, %v329
    %v331 = vpop.f32.mrf.mxu0
    %332 = vdwg.mxu0
    %v333 = vlaneseq
    %v334 = vshrl.u32 %v333, 7
    %v335 = vlaneseq
    %v336 = vshrl.u32 %v335, 7
    %v337 = vsub.s32 0, %v336
    %v338 = vrot.slane %v72, %v337
    %vm339 = vcmp.eq.s32.totalorder %v334, %v338
    %v340 = vsel %vm339, %v193, 0.0
    %vm341 = vcmask 1043456
    %v342 = vsel %vm341, %v340, 0.0
    %v343 = vrot.slane %v342, 4
    %v344 = vadd.f32 %v342, %v343
    %v345 = vrot.slane %v344, 2
    %v346 = vadd.f32 %v344, %v345
    %v347 = vrot.slane %v346, 1
    %v348 = vadd.f32 %v346, %v347
    %v349 = vmul.f32 %v73, %v330
    %v350 = vrsqrt.pop %v349
    %v351 = vmul.f32 %v349, %v350
    %vm352 = vcmp.eq.f32.partialorder %v349, inf
    %v353 = vsel %vm352, %v349, %v351
    %vm354 = vcmp.eq.f32.partialorder %v349, 0.0
    %v355 = vand.u32 %v349, 2147483648
    %v356 = vsel %vm354, %v355, %v353
    %v357 = vmax.f32 %v356, 1e-08
    %v358 = vrcp.pop %v357
    %v359 = vmul.f32 %v348, %v358
    %v360 = vmul.f32 %v359, 50.0
    %361 = vst [vmem:[#allocation8] sm:$0x1] %v360
    // Predicated region
    $region30: #{tpu_custom_call.1} parent=1 // pred_check
      _
    $region31: #{tpu_custom_call.1} parent=1 // pred_check_branch
      %363 = sbr.rel (0) target = $region33
    $region32: #{tpu_custom_call.1} parent=1 // pred_region
      %s365 = ssub.s32 16, 16
      %366 = vsyncadd [#allocation4], %s365
      %s368 = sshll.u32 [#allocation8], 4
      %s369 = int_to_ptr.vmem [resolvable:$true] %s368
      %371 = dma.vmem_to_hbm [thread:$0]  %s369, 16, %s4, [#allocation4]
    $region33: #{tpu_custom_call.1} parent=1 // pred_fallthru
      _
    // Predicated region
    $region34: #{tpu_custom_call.1} parent=1 // pred_check
      _
    $region35: #{tpu_custom_call.1} parent=1 // pred_check_branch
      %373 = sbr.rel (0) target = $region37
    $region36: #{tpu_custom_call.1} parent=1 // pred_region
      %374 = dma.done [#allocation4], 16
    $region37: #{tpu_custom_call.1} parent=1 // pred_fallthru
      _
    %375 = vsyncpa [#allocation3], 1
    %376 = vsyncpa [#allocation6], 1
    %377 = vsyncpa [#allocation4], 1

</llo_original>
